<compile_context>
chip_gen: v6e
topology: v6e:2x2x1
jax: 0.10.0
libtpu: 0.0.40
codegen_flags: <defaults>
</compile_context>

<pallas_src>
import functools

import jax
import jax.numpy as jnp
import numpy as np
from jax.experimental import pallas as pl
from jax.experimental.pallas import tpu as pltpu

# Layer sizes from the PyTorch module.
DIMS = (768, 1024, 128, 64, 16, 1)


# --------------------------------------------------------------------------- #
# Kernel: one batch tile -> per-row affine scalar.
# --------------------------------------------------------------------------- #
def mlp_kernel(x_ref, w_ref, b_ref, o_ref):
    # x tile: (block_b, 768).  Accept f32 or bf16 input; compute in f32.
    x = x_ref[...].astype(jnp.float32)
    w = w_ref[...]                                   # (1, 768) f32, broadcast over rows
    # VPU multiply + lane reduction (no MXU): (block_b, 768) -> (block_b, 1).
    r = jnp.sum(x * w, axis=-1, keepdims=True)
    # Dropout layers: identity at inference -> no-ops.
    o_ref[...] = (r + b_ref[...]).astype(o_ref.dtype)


# --------------------------------------------------------------------------- #
# One-time parameter preprocessing (run ONCE, outside the per-call jit).
# --------------------------------------------------------------------------- #
def prepare_params(params):
    """Fold the fully-affine network into (w_row [1,768], b_all [1,1]).

    ((x@W1+b1)@W2+b2)...@W5+b5 == x @ (W1 W2 ... W5) + (b1 W2..W5 + ... + b5)
    """
    (w_acc, b_acc) = params[0]
    hi = jax.lax.Precision.HIGHEST
    for (w, b) in params[1:]:
        w_acc = jnp.dot(w_acc, w, precision=hi)
        b_acc = jnp.dot(b_acc, w, precision=hi) + b
    w_row = w_acc.T.astype(jnp.float32)              # [1, 768]
    b_all = b_acc.astype(jnp.float32)                # [1, 1]
    return w_row, b_all


def _round_up(v, m):
    return ((v + m - 1) // m) * m


def _select_block_b(B):
    """Batch tile: >=2 grid steps when possible, multiple of 256, <=1024 rows."""
    if B <= 256:
        return _round_up(max(B, 8), 8)               # single (possibly ragged) step
    return max(256, min(1024, _round_up((B + 1) // 2, 256)))


# --------------------------------------------------------------------------- #
# Forward wrapper.
# --------------------------------------------------------------------------- #
@functools.partial(jax.jit, static_argnames=("block_b",))
def mlp_forward(x, w_row, b_all, *, block_b=None):
    """x: [B, 768]; (w_row, b_all) from prepare_params.  Returns [B, 1] f32."""
    B, F = x.shape
    assert F == DIMS[0]
    if block_b is None:
        block_b = _select_block_b(B)

    num_tiles = pl.cdiv(B, block_b)                  # ragged last tile handled by Pallas

    in_specs = [
        pl.BlockSpec((block_b, DIMS[0]), lambda i: (i, 0)),   # x tile (only real HBM traffic)
        pl.BlockSpec((1, DIMS[0]), lambda i: (0, 0)),         # folded weight row (resident)
        pl.BlockSpec((1, 1), lambda i: (0, 0)),               # folded bias (resident)
    ]
    out_specs = pl.BlockSpec((block_b, 1), lambda i: (i, 0))  # [B, 1] directly

    out = pl.pallas_call(
        mlp_kernel,
        out_shape=jax.ShapeDtypeStruct((B, 1), jnp.float32),
        grid=(num_tiles,),
        in_specs=in_specs,
        out_specs=out_specs,
        compiler_params=pltpu.CompilerParams(
            dimension_semantics=("parallel",),
            vmem_limit_bytes=16 * 1024 * 1024,
        ),
    )(x, w_row, b_all)
    return out


# --------------------------------------------------------------------------- #
# Reference / init helpers.
# --------------------------------------------------------------------------- #
def init_params(key):
    """Deterministic synthetic init (matches nn.Linear shapes, stored as W.T)."""
    params = []
    for d_in, d_out in zip(DIMS[:-1], DIMS[1:]):
        key, kw, kb = jax.random.split(key, 3)
        bound = 1.0 / np.sqrt(d_in)
        w = jax.random.uniform(kw, (d_in, d_out), jnp.float32, -bound, bound)
        b = jax.random.uniform(kb, (1, d_out), jnp.float32, -bound, bound)
        params.append((w, b))
    return params


def mlp_reference_np(x, params):
    """Pure numpy f32 per-layer reference (original module semantics)."""
    h = np.asarray(x, np.float32)
    for (w, b) in params:
        h = h @ np.asarray(w, np.float32) + np.asarray(b, np.float32)
    return h


# TODO(synk): training-mode Dropout (prng-masked) is intentionally not
# implemented; forward() here matches the module's inference semantics.

if __name__ == "__main__":
    key = jax.random.PRNGKey(0)
    key, kx = jax.random.split(key)

    # B=300: exercises multi-step grid (2 tiles of 256) + ragged trailing block.
    B = 300
    x = jax.random.normal(kx, (B, DIMS[0]), jnp.float32)
    params = init_params(key)

    # One-time fold of all five Linears into a single [768,1] contraction.
    w_row, b_all = prepare_params(params)

    out = mlp_forward(x, w_row, b_all)
    out = jax.block_until_ready(out)

    ref = mlp_reference_np(np.asarray(x), params)
    np.testing.assert_allclose(np.asarray(out), ref, rtol=5e-3, atol=2e-3)
    print("KERNEL_OK")
</pallas_src>

<mosaic_0001>
module attributes {stable_mosaic.version = 11 : i64} {
  func.func @mlp_kernel(%arg0: i32, %arg1: memref<256x768xf32, #tpu.memory_space<vmem>>, %arg2: memref<1x768xf32, #tpu.memory_space<vmem>>, %arg3: memref<1x1xf32, #tpu.memory_space<vmem>>, %arg4: memref<256x1xf32, #tpu.memory_space<vmem>>) attributes {dimension_semantics = [#tpu.dimension_semantics<parallel>], iteration_bounds = array<i64: 2>, scalar_prefetch = 0 : i64, scratch_operands = 0 : i64, tpu.core_type = #tpu.core_type<tc>, window_params = [{transform_indices = @transform_0, window_bounds = array<i64: 256, 768>}, {pipeline_mode = #tpu.pipeline_mode<synchronous>, transform_indices = @transform_1, window_bounds = array<i64: 1, 768>}, {pipeline_mode = #tpu.pipeline_mode<synchronous>, transform_indices = @transform_2, window_bounds = array<i64: 1, 1>}, {transform_indices = @transform_3, window_bounds = array<i64: 256, 1>}]} {
    %c0 = arith.constant 0 : index
    %c0_0 = arith.constant 0 : index
    %0 = vector.load %arg1[%c0, %c0_0] : memref<256x768xf32, #tpu.memory_space<vmem>>, vector<256x768xf32>
    %c0_1 = arith.constant 0 : index
    %c0_2 = arith.constant 0 : index
    %1 = vector.load %arg2[%c0_1, %c0_2] : memref<1x768xf32, #tpu.memory_space<vmem>>, vector<1x768xf32>
    %2 = vector.broadcast %1 : vector<1x768xf32> to vector<256x768xf32>
    %3 = arith.mulf %0, %2 : vector<256x768xf32>
    %cst = arith.constant dense<0.000000e+00> : vector<256xf32>
    %4 = vector.multi_reduction <add>, %3, %cst [1] : vector<256x768xf32> to vector<256xf32>
    %5 = vector.shape_cast %4 : vector<256xf32> to vector<256x1xf32>
    %c0_3 = arith.constant 0 : index
    %c0_4 = arith.constant 0 : index
    %6 = vector.load %arg3[%c0_3, %c0_4] : memref<1x1xf32, #tpu.memory_space<vmem>>, vector<1x1xf32>
    %7 = vector.broadcast %6 : vector<1x1xf32> to vector<256x1xf32>
    %8 = arith.addf %5, %7 : vector<256x1xf32>
    %c0_5 = arith.constant 0 : index
    %c0_6 = arith.constant 0 : index
    %9 = vector.load %arg4[%c0_5, %c0_6] : memref<256x1xf32, #tpu.memory_space<vmem>>, vector<256x1xf32>
    tpu.vector_store %arg4[%c0_5, %c0_6], %8 {strides = array<i32>} : memref<256x1xf32, #tpu.memory_space<vmem>>, vector<256x1xf32>,
    return
  }
  func.func @transform_0(%arg0: i32) -> (i32, i32) {
    %c0_i32 = arith.constant 0 : i32
    %c0_i32_0 = arith.constant 0 : i32
    return %arg0, %c0_i32 : i32, i32
  }
  func.func @transform_1(%arg0: i32) -> (i32, i32) {
    %c0_i32 = arith.constant 0 : i32
    %c0_i32_0 = arith.constant 0 : i32
    %c0_i32_1 = arith.constant 0 : i32
    return %c0_i32, %c0_i32_0 : i32, i32
  }
  func.func @transform_2(%arg0: i32) -> (i32, i32) {
    %c0_i32 = arith.constant 0 : i32
    %c0_i32_0 = arith.constant 0 : i32
    %c0_i32_1 = arith.constant 0 : i32
    return %c0_i32, %c0_i32_0 : i32, i32
  }
  func.func @transform_3(%arg0: i32) -> (i32, i32) {
    %c0_i32 = arith.constant 0 : i32
    %c0_i32_0 = arith.constant 0 : i32
    return %arg0, %c0_i32 : i32, i32
  }
}

</mosaic_0001>

<llo_original>
// kernel: mlp_forward.1
$region0: #{mlp_forward.1}
  #allocation0 [shape = 'u32[]', space=smem, size = 0x4, offset = 0x4, fixed_abs, tag = 'smem constant byte address 0x4 - core index']
  #allocation1 [shape = 'u32[144,128]{1,0:T(1,128)}', space=vmem, size = 0x12000, scoped, tag = 'internal scratch']
  #allocation2 [shape = 'f32[1,1]{1,0:T(1,128)S(1)}', space=vmem, size = 0x200, scoped, tag = 'scoped memory for mlp_forward.1']
  %s0 = inlined_call_operand.hbm [shape: f32[300,768], index: 0, kind: input, shape index: {}]
  %s1 = inlined_call_operand.hbm [shape: f32[1,768], index: 1, kind: input, shape index: {}]
  %s2 = inlined_call_operand.<no memory space> [shape: f32[1,1], index: 2, kind: input, shape index: {}]
  %s3 = inlined_call_operand.vmem [shape: f32[300,1], index: 3, kind: output, shape index: {}]
  %s4 = sld [smem:[#allocation0]]
  $region101: #{mlp_forward.1} parent=0
    _
  %s6 = ssub.s32 1, %s4
  %s7 = scalar_select 0, %s6, %s4
  %v8 = vstv %s2
  %9 = vst [vmem:[#allocation2] sm:$0x1] %v8
  $region1: #{mlp_forward.1} parent=0
    #allocation3 [shape = 'u8[1572864]{0}', space=vmem, size = 0x180000, scoped, tag = 'input window, operand 0']
    #allocation4 [shape = 's32[2]{0}', space=sflag, size = 0x8, scoped, tag = 'scoped memory for mlp_forward.1']
    #allocation5 [shape = 'u8[3072]{0}', space=vmem, size = 0xc00, scoped, tag = 'input window, operand 1, single buffered']
    #allocation6 [shape = 's32[1]{0}', space=sflag, size = 0x4, scoped, tag = 'scoped memory for mlp_forward.1']
    #allocation7 [shape = 'u8[262144]{0}', space=vmem, size = 0x40000, scoped, tag = 'output window, operand 0']
    %10 = vsyncpa [#allocation4], 0
    %s11 = scalar_lea.sflag [#allocation4], 1
    %12 = vsyncpa %s11, 0
    %13 = vsyncpa [#allocation6], 0
    loop: start=0, step=1, limit=4
    $region2: #{mlp_forward.1} parent=1 // loop_pre_header
      _
    $region3: #{mlp_forward.1} parent=1 // loop_header
      %s15 = sphi 0, %s19
      %p16 = scmp.ge.s32.totalorder %s15, 4
      %s25 = sphi 0, %s27
      %s28 = sphi 0, %s25
      %s29 = sphi 0, %s28
      %s45 = sphi 0, %s29
      %s49 = sphi 0, %s49
      %s51 = sphi 0, %s49
      %s52 = sphi 0, %s51
      %s66 = sphi 0, %s52
      %s70 = sphi 0, %s70
      %s72 = sphi 0, %s70
      %s73 = sphi 0, %s72
      %s87 = sphi 0, %s73
      %s93 = sphi 0, %s95
      %s96 = sphi 0, %s93
      %s97 = sphi 0, %s96
      %s113 = sphi 0, %s97
    $region4: #{mlp_forward.1} parent=1 // loop_header_branch
      %18 = sbr.rel (%p16) target = $region8
    $region5: #{mlp_forward.1} parent=1 // loop_body
      %s20 = ssub.s32 %s15, 1
      %s21 = ssub.s32 %s15, 2
      %s22 = sadd.s32 %s15, 1
      %s23 = ssub.s32 %s15, %s22
      %p24 = scmp.eq.s32.totalorder %s23, 0
      %s26 = sadd.s32 %s25, 1
      %s27 = scalar_select %p24, %s25, %s26
      %p30 = pneg %p24
      %p31 = scmp.eq.s32.totalorder %s15, 1
      %p32 = por %p30, %p31
      %p33 = scmp.ne.s32.totalorder %s25, %s28
      %p34 = scmp.eq.s32.totalorder %s15, 0
      %p35 = por %p33, %p34
      %p36 = scmp.ne.s32.totalorder %s25, %s28
      %p37 = scmp.eq.s32.totalorder %s20, 1
      %p38 = por %p36, %p37
      %p39 = scmp.ne.s32.totalorder %s28, %s29
      %p40 = scmp.eq.s32.totalorder %s20, 0
      %p41 = por %p39, %p40
      %p42 = scmp.ne.s32.totalorder %s28, %s29
      %p43 = scmp.eq.s32.totalorder %s21, 1
      %p44 = por %p42, %p43
      %p46 = scmp.ne.s32.totalorder %s29, %s45
      %p47 = scmp.eq.s32.totalorder %s21, 0
      %p48 = por %p46, %p47
      %s50 = sadd.s32 %s49, 1
      %p53 = scmp.eq.s32.totalorder %s15, 1
      %p54 = scmp.ne.s32.totalorder %s49, %s51
      %p55 = scmp.eq.s32.totalorder %s15, 0
      %p56 = por %p54, %p55
      %p57 = scmp.ne.s32.totalorder %s49, %s51
      %p58 = scmp.eq.s32.totalorder %s20, 1
      %p59 = por %p57, %p58
      %p60 = scmp.ne.s32.totalorder %s51, %s52
      %p61 = scmp.eq.s32.totalorder %s20, 0
      %p62 = por %p60, %p61
      %p63 = scmp.ne.s32.totalorder %s51, %s52
      %p64 = scmp.eq.s32.totalorder %s21, 1
      %p65 = por %p63, %p64
      %p67 = scmp.ne.s32.totalorder %s52, %s66
      %p68 = scmp.eq.s32.totalorder %s21, 0
      %p69 = por %p67, %p68
      %s71 = sadd.s32 %s70, 1
      %p74 = scmp.eq.s32.totalorder %s15, 1
      %p75 = scmp.ne.s32.totalorder %s70, %s72
      %p76 = scmp.eq.s32.totalorder %s15, 0
      %p77 = por %p75, %p76
      %p78 = scmp.ne.s32.totalorder %s70, %s72
      %p79 = scmp.eq.s32.totalorder %s20, 1
      %p80 = por %p78, %p79
      %p81 = scmp.ne.s32.totalorder %s72, %s73
      %p82 = scmp.eq.s32.totalorder %s20, 0
      %p83 = por %p81, %p82
      %p84 = scmp.ne.s32.totalorder %s72, %s73
      %p85 = scmp.eq.s32.totalorder %s21, 1
      %p86 = por %p84, %p85
      %p88 = scmp.ne.s32.totalorder %s73, %s87
      %p89 = scmp.eq.s32.totalorder %s21, 0
      %p90 = por %p88, %p89
      %s91 = ssub.s32 %s15, %s22
      %p92 = scmp.eq.s32.totalorder %s91, 0
      %s94 = sadd.s32 %s93, 1
      %s95 = scalar_select %p92, %s93, %s94
      %p98 = pneg %p92
      %p99 = scmp.eq.s32.totalorder %s15, 1
      %p100 = por %p98, %p99
      %p101 = scmp.ne.s32.totalorder %s93, %s96
      %p102 = scmp.eq.s32.totalorder %s15, 0
      %p103 = por %p101, %p102
      %p104 = scmp.ne.s32.totalorder %s93, %s96
      %p105 = scmp.eq.s32.totalorder %s20, 1
      %p106 = por %p104, %p105
      %p107 = scmp.ne.s32.totalorder %s96, %s97
      %p108 = scmp.eq.s32.totalorder %s20, 0
      %p109 = por %p107, %p108
      %p110 = scmp.ne.s32.totalorder %s96, %s97
      %p111 = scmp.eq.s32.totalorder %s21, 1
      %p112 = por %p110, %p111
      %p114 = scmp.ne.s32.totalorder %s97, %s113
      %p115 = scmp.eq.s32.totalorder %s21, 0
      %p116 = por %p114, %p115
      %p117 = scmp.le.s32.totalorder 1, %s15
      %p118 = scmp.lt.s32.totalorder %s15, 3
      %p119 = pnand %p117, %p118
      %p120 = pneg %p119
      // Predicated region
      $region9: #{mlp_forward.1} parent=5 // pred_check
        _
      $region10: #{mlp_forward.1} parent=5 // pred_check_branch
        %122 = sbr.rel (%p119) target = $region12
      $region11: #{mlp_forward.1} parent=5 // pred_region
        %s123 = ssub.s32 %s15, 1
        // Predicated region
        $region13: #{mlp_forward.1} parent=11 // pred_check
          %p124 = pneg %p62
        $region14: #{mlp_forward.1} parent=11 // pred_check_branch
          %126 = sbr.rel (%p124) target = $region16
        $region15: #{mlp_forward.1} parent=11 // pred_region
          %s128 = ssub.s32 96, 96
          %129 = vsyncadd [#allocation6], %s128
          %s131 = sshll.u32 [#allocation5], 4
          %s132 = int_to_ptr.vmem [resolvable:$true] %s131
          %134 = dma.hbm_to_vmem [thread:$0]  %s1, 96, %s132, [#allocation6]
        $region16: #{mlp_forward.1} parent=11 // pred_fallthru
          _
        // Predicated region
        $region17: #{mlp_forward.1} parent=11 // pred_check
          %p135 = pneg %p83
        $region18: #{mlp_forward.1} parent=11 // pred_check_branch
          %137 = sbr.rel (%p135) target = $region20
        $region19: #{mlp_forward.1} parent=11 // pred_region
          _
        $region20: #{mlp_forward.1} parent=11 // pred_fallthru
          _
      $region12: #{mlp_forward.1} parent=5 // pred_fallthru
        _
      %p138 = scmp.lt.s32.totalorder %s15, 2
      // Predicated region
      $region21: #{mlp_forward.1} parent=5 // pred_check
        %p139 = pneg %p138
      $region22: #{mlp_forward.1} parent=5 // pred_check_branch
        %141 = sbr.rel (%p139) target = $region24
      $region23: #{mlp_forward.1} parent=5 // pred_region
        // Predicated region
        $region25: #{mlp_forward.1} parent=23 // pred_check
          %p142 = pneg %p35
        $region26: #{mlp_forward.1} parent=23 // pred_check_branch
          %144 = sbr.rel (%p142) target = $region28
        $region27: #{mlp_forward.1} parent=23 // pred_region
          %s145 = sand.u32 %s25, 1
          %s146 = scalar_lea.sflag [#allocation4], %s145
          %s147 = sand.u32 %s25, 1
          %s148 = smul.addr %s147, 1536
          %s149 = scalar_lea.vmem [#allocation3], %s148
          %s150 = smul.u32 32, %s15
          %s151 = ssub.s32 38, %s150
          %p152 = scmp.lt.s32.totalorder %s151, 32
          %s153 = scalar_select %p152, %s151, 32
          %s154 = smul.u32 128, %s153
          %s155 = smul.u32 %s154, 6
          %s157 = ssub.s32 24576, %s155
          %158 = vsyncadd %s146, %s157
          %p159 = scmp.ne.s32.totalorder 0, %s155
          %s160 = smul.addr %s150, 6
          %s161 = smul.addr %s160, 128
          %s162 = scalar_lea.hbm %s0, %s161
          %s163 = smul.u32 48, %s153
          %s164 = sshll.u32 %s149, 4
          %s165 = int_to_ptr.vmem [resolvable:$true] %s164
          %s166 = sshll.u32 %s163, 4
          %170 = dma.hbm_to_vmem [thread:$0]  (%p159), %s162, %s166, %s165, %s146, 768, 768, 48
        $region28: #{mlp_forward.1} parent=23 // pred_fallthru
          _
      $region24: #{mlp_forward.1} parent=5 // pred_fallthru
        _
      %p171 = scmp.le.s32.totalorder 1, %s15
      %p172 = scmp.lt.s32.totalorder %s15, 3
      %p173 = pnand %p171, %p172
      %p174 = pneg %p173
      // Predicated region
      $region29: #{mlp_forward.1} parent=5 // pred_check
        _
      $region30: #{mlp_forward.1} parent=5 // pred_check_branch
        %176 = sbr.rel (%p173) target = $region32
      $region31: #{mlp_forward.1} parent=5 // pred_region
        %s177 = ssub.s32 %s15, 1
        %s178 = sand.u32 %s28, 1
        %s179 = scalar_lea.sflag [#allocation4], %s178
        %s180 = sand.u32 %s28, 1
        %s181 = smul.addr %s180, 1536
        %s182 = scalar_lea.vmem [#allocation3], %s181
        // Predicated region
        $region33: #{mlp_forward.1} parent=31 // pred_check
          %p183 = pneg %p41
        $region34: #{mlp_forward.1} parent=31 // pred_check_branch
          %185 = sbr.rel (%p183) target = $region36
        $region35: #{mlp_forward.1} parent=31 // pred_region
          %186 = dma.done %s179, 24576
        $region36: #{mlp_forward.1} parent=31 // pred_fallthru
          _
        // Predicated region
        $region37: #{mlp_forward.1} parent=31 // pred_check
          %p187 = pneg %p62
        $region38: #{mlp_forward.1} parent=31 // pred_check_branch
          %189 = sbr.rel (%p187) target = $region40
        $region39: #{mlp_forward.1} parent=31 // pred_region
          %190 = dma.done [#allocation6], 96
        $region40: #{mlp_forward.1} parent=31 // pred_fallthru
          _
        %s191 = sand.u32 %s28, 1
        %s192 = scalar_lea.sflag [#allocation4], %s191
        %s193 = sand.u32 %s28, 1
        %s194 = smul.addr %s193, 1536
        %s195 = scalar_lea.vmem [#allocation3], %s194
        %p196 = pneg %p41
        %p197 = pneg %p38
        %p198 = pneg %p62
        %p199 = pneg %p59
        %p200 = pneg %p83
        %p201 = pneg %p80
        %p202 = pneg %p109
        %p203 = pneg %p106
        %s204 = sand.u32 %s96, 1
        %s205 = sand.u32 %s96, 1
        %s206 = smul.addr %s205, 256
        %s207 = scalar_lea.vmem [#allocation7], %s206
        %s208 = smul.u32 32, %s20
        %s209 = ssub.s32 38, %s208
        %p210 = scmp.lt.s32.totalorder %s209, 32
        %s211 = scalar_select %p210, %s209, 32
        %s212 = smul.u32 128, %s211
        %s213 = smul.u32 %s212, 6
        %s214 = smul.u32 32, %s20
        %s215 = ssub.s32 38, %s214
        %p216 = scmp.lt.s32.totalorder %s215, 32
        %s217 = scalar_select %p216, %s215, 32
        %s218 = smul.u32 128, %s217
        %v219 = vld [vmem:[%s182] sm:$0xff]
        %v220 = vld [vmem:[%s182 + $0x8] sm:$0xff]
        %v221 = vld [vmem:[%s182 + $0x10] sm:$0xff]
        %v222 = vld [vmem:[%s182 + $0x18] sm:$0xff]
        %v223 = vld [vmem:[%s182 + $0x20] sm:$0xff]
        %v224 = vld [vmem:[%s182 + $0x28] sm:$0xff]
        %v225 = vld [vmem:[%s182 + $0x30] sm:$0xff]
        %v226 = vld [vmem:[%s182 + $0x38] sm:$0xff]
        %v227 = vld [vmem:[%s182 + $0x40] sm:$0xff]
        %v228 = vld [vmem:[%s182 + $0x48] sm:$0xff]
        %v229 = vld [vmem:[%s182 + $0x50] sm:$0xff]
        %v230 = vld [vmem:[%s182 + $0x58] sm:$0xff]
        %v231 = vld [vmem:[%s182 + $0x60] sm:$0xff]
        %v232 = vld [vmem:[%s182 + $0x68] sm:$0xff]
        %v233 = vld [vmem:[%s182 + $0x70] sm:$0xff]
        %v234 = vld [vmem:[%s182 + $0x78] sm:$0xff]
        %v235 = vld [vmem:[%s182 + $0x80] sm:$0xff]
        %v236 = vld [vmem:[%s182 + $0x88] sm:$0xff]
        %v237 = vld [vmem:[%s182 + $0x90] sm:$0xff]
        %v238 = vld [vmem:[%s182 + $0x98] sm:$0xff]
        %v239 = vld [vmem:[%s182 + $0xa0] sm:$0xff]
        %v240 = vld [vmem:[%s182 + $0xa8] sm:$0xff]
        %v241 = vld [vmem:[%s182 + $0xb0] sm:$0xff]
        %v242 = vld [vmem:[%s182 + $0xb8] sm:$0xff]
        %v243 = vld [vmem:[%s182 + $0xc0] sm:$0xff]
        %v244 = vld [vmem:[%s182 + $0xc8] sm:$0xff]
        %v245 = vld [vmem:[%s182 + $0xd0] sm:$0xff]
        %v246 = vld [vmem:[%s182 + $0xd8] sm:$0xff]
        %v247 = vld [vmem:[%s182 + $0xe0] sm:$0xff]
        %v248 = vld [vmem:[%s182 + $0xe8] sm:$0xff]
        %v249 = vld [vmem:[%s182 + $0xf0] sm:$0xff]
        %v250 = vld [vmem:[%s182 + $0xf8] sm:$0xff]
        %v251 = vld [vmem:[%s182 + $0x100] sm:$0xff]
        %v252 = vld [vmem:[%s182 + $0x108] sm:$0xff]
        %v253 = vld [vmem:[%s182 + $0x110] sm:$0xff]
        %v254 = vld [vmem:[%s182 + $0x118] sm:$0xff]
        %v255 = vld [vmem:[%s182 + $0x120] sm:$0xff]
        %v256 = vld [vmem:[%s182 + $0x128] sm:$0xff]
        %v257 = vld [vmem:[%s182 + $0x130] sm:$0xff]
        %v258 = vld [vmem:[%s182 + $0x138] sm:$0xff]
        %v259 = vld [vmem:[%s182 + $0x140] sm:$0xff]
        %v260 = vld [vmem:[%s182 + $0x148] sm:$0xff]
        %v261 = vld [vmem:[%s182 + $0x150] sm:$0xff]
        %v262 = vld [vmem:[%s182 + $0x158] sm:$0xff]
        %v263 = vld [vmem:[%s182 + $0x160] sm:$0xff]
        %v264 = vld [vmem:[%s182 + $0x168] sm:$0xff]
        %v265 = vld [vmem:[%s182 + $0x170] sm:$0xff]
        %v266 = vld [vmem:[%s182 + $0x178] sm:$0xff]
        %v267 = vld [vmem:[%s182 + $0x180] sm:$0xff]
        %v268 = vld [vmem:[%s182 + $0x188] sm:$0xff]
        %v269 = vld [vmem:[%s182 + $0x190] sm:$0xff]
        %v270 = vld [vmem:[%s182 + $0x198] sm:$0xff]
        %v271 = vld [vmem:[%s182 + $0x1a0] sm:$0xff]
        %v272 = vld [vmem:[%s182 + $0x1a8] sm:$0xff]
        %v273 = vld [vmem:[%s182 + $0x1b0] sm:$0xff]
        %v274 = vld [vmem:[%s182 + $0x1b8] sm:$0xff]
        %v275 = vld [vmem:[%s182 + $0x1c0] sm:$0xff]
        %v276 = vld [vmem:[%s182 + $0x1c8] sm:$0xff]
        %v277 = vld [vmem:[%s182 + $0x1d0] sm:$0xff]
        %v278 = vld [vmem:[%s182 + $0x1d8] sm:$0xff]
        %v279 = vld [vmem:[%s182 + $0x1e0] sm:$0xff]
        %v280 = vld [vmem:[%s182 + $0x1e8] sm:$0xff]
        %v281 = vld [vmem:[%s182 + $0x1f0] sm:$0xff]
        %v282 = vld [vmem:[%s182 + $0x1f8] sm:$0xff]
        %v283 = vld [vmem:[%s182 + $0x200] sm:$0xff]
        %v284 = vld [vmem:[%s182 + $0x208] sm:$0xff]
        %v285 = vld [vmem:[%s182 + $0x210] sm:$0xff]
        %v286 = vld [vmem:[%s182 + $0x218] sm:$0xff]
        %v287 = vld [vmem:[%s182 + $0x220] sm:$0xff]
        %v288 = vld [vmem:[%s182 + $0x228] sm:$0xff]
        %v289 = vld [vmem:[%s182 + $0x230] sm:$0xff]
        %v290 = vld [vmem:[%s182 + $0x238] sm:$0xff]
        %v291 = vld [vmem:[%s182 + $0x240] sm:$0xff]
        %v292 = vld [vmem:[%s182 + $0x248] sm:$0xff]
        %v293 = vld [vmem:[%s182 + $0x250] sm:$0xff]
        %v294 = vld [vmem:[%s182 + $0x258] sm:$0xff]
        %v295 = vld [vmem:[%s182 + $0x260] sm:$0xff]
        %v296 = vld [vmem:[%s182 + $0x268] sm:$0xff]
        %v297 = vld [vmem:[%s182 + $0x270] sm:$0xff]
        %v298 = vld [vmem:[%s182 + $0x278] sm:$0xff]
        %v299 = vld [vmem:[%s182 + $0x280] sm:$0xff]
        %v300 = vld [vmem:[%s182 + $0x288] sm:$0xff]
        %v301 = vld [vmem:[%s182 + $0x290] sm:$0xff]
        %v302 = vld [vmem:[%s182 + $0x298] sm:$0xff]
        %v303 = vld [vmem:[%s182 + $0x2a0] sm:$0xff]
        %v304 = vld [vmem:[%s182 + $0x2a8] sm:$0xff]
        %v305 = vld [vmem:[%s182 + $0x2b0] sm:$0xff]
        %v306 = vld [vmem:[%s182 + $0x2b8] sm:$0xff]
        %v307 = vld [vmem:[%s182 + $0x2c0] sm:$0xff]
        %v308 = vld [vmem:[%s182 + $0x2c8] sm:$0xff]
        %v309 = vld [vmem:[%s182 + $0x2d0] sm:$0xff]
        %v310 = vld [vmem:[%s182 + $0x2d8] sm:$0xff]
        %v311 = vld [vmem:[%s182 + $0x2e0] sm:$0xff]
        %v312 = vld [vmem:[%s182 + $0x2e8] sm:$0xff]
        %v313 = vld [vmem:[%s182 + $0x2f0] sm:$0xff]
        %v314 = vld [vmem:[%s182 + $0x2f8] sm:$0xff]
        %v315 = vld [vmem:[%s182 + $0x300] sm:$0xff]
        %v316 = vld [vmem:[%s182 + $0x308] sm:$0xff]
        %v317 = vld [vmem:[%s182 + $0x310] sm:$0xff]
        %v318 = vld [vmem:[%s182 + $0x318] sm:$0xff]
        %v319 = vld [vmem:[%s182 + $0x320] sm:$0xff]
        %v320 = vld [vmem:[%s182 + $0x328] sm:$0xff]
        %v321 = vld [vmem:[%s182 + $0x330] sm:$0xff]
        %v322 = vld [vmem:[%s182 + $0x338] sm:$0xff]
        %v323 = vld [vmem:[%s182 + $0x340] sm:$0xff]
        %v324 = vld [vmem:[%s182 + $0x348] sm:$0xff]
        %v325 = vld [vmem:[%s182 + $0x350] sm:$0xff]
        %v326 = vld [vmem:[%s182 + $0x358] sm:$0xff]
        %v327 = vld [vmem:[%s182 + $0x360] sm:$0xff]
        %v328 = vld [vmem:[%s182 + $0x368] sm:$0xff]
        %v329 = vld [vmem:[%s182 + $0x370] sm:$0xff]
        %v330 = vld [vmem:[%s182 + $0x378] sm:$0xff]
        %v331 = vld [vmem:[%s182 + $0x380] sm:$0xff]
        %v332 = vld [vmem:[%s182 + $0x388] sm:$0xff]
        %v333 = vld [vmem:[%s182 + $0x390] sm:$0xff]
        %v334 = vld [vmem:[%s182 + $0x398] sm:$0xff]
        %v335 = vld [vmem:[%s182 + $0x3a0] sm:$0xff]
        %v336 = vld [vmem:[%s182 + $0x3a8] sm:$0xff]
        %v337 = vld [vmem:[%s182 + $0x3b0] sm:$0xff]
        %v338 = vld [vmem:[%s182 + $0x3b8] sm:$0xff]
        %v339 = vld [vmem:[%s182 + $0x3c0] sm:$0xff]
        %v340 = vld [vmem:[%s182 + $0x3c8] sm:$0xff]
        %v341 = vld [vmem:[%s182 + $0x3d0] sm:$0xff]
        %v342 = vld [vmem:[%s182 + $0x3d8] sm:$0xff]
        %v343 = vld [vmem:[%s182 + $0x3e0] sm:$0xff]
        %v344 = vld [vmem:[%s182 + $0x3e8] sm:$0xff]
        %v345 = vld [vmem:[%s182 + $0x3f0] sm:$0xff]
        %v346 = vld [vmem:[%s182 + $0x3f8] sm:$0xff]
        %v347 = vld [vmem:[%s182 + $0x400] sm:$0xff]
        %v348 = vld [vmem:[%s182 + $0x408] sm:$0xff]
        %v349 = vld [vmem:[%s182 + $0x410] sm:$0xff]
        %v350 = vld [vmem:[%s182 + $0x418] sm:$0xff]
        %v351 = vld [vmem:[%s182 + $0x420] sm:$0xff]
        %v352 = vld [vmem:[%s182 + $0x428] sm:$0xff]
        %v353 = vld [vmem:[%s182 + $0x430] sm:$0xff]
        %v354 = vld [vmem:[%s182 + $0x438] sm:$0xff]
        %v355 = vld [vmem:[%s182 + $0x440] sm:$0xff]
        %v356 = vld [vmem:[%s182 + $0x448] sm:$0xff]
        %v357 = vld [vmem:[%s182 + $0x450] sm:$0xff]
        %v358 = vld [vmem:[%s182 + $0x458] sm:$0xff]
        %v359 = vld [vmem:[%s182 + $0x460] sm:$0xff]
        %v360 = vld [vmem:[%s182 + $0x468] sm:$0xff]
        %v361 = vld [vmem:[%s182 + $0x470] sm:$0xff]
        %v362 = vld [vmem:[%s182 + $0x478] sm:$0xff]
        %v363 = vld [vmem:[%s182 + $0x480] sm:$0xff]
        %v364 = vld [vmem:[%s182 + $0x488] sm:$0xff]
        %v365 = vld [vmem:[%s182 + $0x490] sm:$0xff]
        %v366 = vld [vmem:[%s182 + $0x498] sm:$0xff]
        %v367 = vld [vmem:[%s182 + $0x4a0] sm:$0xff]
        %v368 = vld [vmem:[%s182 + $0x4a8] sm:$0xff]
        %v369 = vld [vmem:[%s182 + $0x4b0] sm:$0xff]
        %v370 = vld [vmem:[%s182 + $0x4b8] sm:$0xff]
        %v371 = vld [vmem:[%s182 + $0x4c0] sm:$0xff]
        %v372 = vld [vmem:[%s182 + $0x4c8] sm:$0xff]
        %v373 = vld [vmem:[%s182 + $0x4d0] sm:$0xff]
        %v374 = vld [vmem:[%s182 + $0x4d8] sm:$0xff]
        %v375 = vld [vmem:[%s182 + $0x4e0] sm:$0xff]
        %v376 = vld [vmem:[%s182 + $0x4e8] sm:$0xff]
        %v377 = vld [vmem:[%s182 + $0x4f0] sm:$0xff]
        %v378 = vld [vmem:[%s182 + $0x4f8] sm:$0xff]
        %v379 = vld [vmem:[%s182 + $0x500] sm:$0xff]
        %v380 = vld [vmem:[%s182 + $0x508] sm:$0xff]
        %v381 = vld [vmem:[%s182 + $0x510] sm:$0xff]
        %v382 = vld [vmem:[%s182 + $0x518] sm:$0xff]
        %v383 = vld [vmem:[%s182 + $0x520] sm:$0xff]
        %v384 = vld [vmem:[%s182 + $0x528] sm:$0xff]
        %v385 = vld [vmem:[%s182 + $0x530] sm:$0xff]
        %v386 = vld [vmem:[%s182 + $0x538] sm:$0xff]
        %v387 = vld [vmem:[%s182 + $0x540] sm:$0xff]
        %v388 = vld [vmem:[%s182 + $0x548] sm:$0xff]
        %v389 = vld [vmem:[%s182 + $0x550] sm:$0xff]
        %v390 = vld [vmem:[%s182 + $0x558] sm:$0xff]
        %v391 = vld [vmem:[%s182 + $0x560] sm:$0xff]
        %v392 = vld [vmem:[%s182 + $0x568] sm:$0xff]
        %v393 = vld [vmem:[%s182 + $0x570] sm:$0xff]
        %v394 = vld [vmem:[%s182 + $0x578] sm:$0xff]
        %v395 = vld [vmem:[%s182 + $0x580] sm:$0xff]
        %v396 = vld [vmem:[%s182 + $0x588] sm:$0xff]
        %v397 = vld [vmem:[%s182 + $0x590] sm:$0xff]
        %v398 = vld [vmem:[%s182 + $0x598] sm:$0xff]
        %v399 = vld [vmem:[%s182 + $0x5a0] sm:$0xff]
        %v400 = vld [vmem:[%s182 + $0x5a8] sm:$0xff]
        %v401 = vld [vmem:[%s182 + $0x5b0] sm:$0xff]
        %v402 = vld [vmem:[%s182 + $0x5b8] sm:$0xff]
        %v403 = vld [vmem:[%s182 + $0x5c0] sm:$0xff]
        %v404 = vld [vmem:[%s182 + $0x5c8] sm:$0xff]
        %v405 = vld [vmem:[%s182 + $0x5d0] sm:$0xff]
        %v406 = vld [vmem:[%s182 + $0x5d8] sm:$0xff]
        %v407 = vld [vmem:[%s182 + $0x5e0] sm:$0xff]
        %v408 = vld [vmem:[%s182 + $0x5e8] sm:$0xff]
        %v409 = vld [vmem:[%s182 + $0x5f0] sm:$0xff]
        %v410 = vld [vmem:[%s182 + $0x5f8] sm:$0xff]
        %v411 = vld [vmem:[#allocation5] sm:$0x3f]
        %v413 = vlaneseq
        %v414 = vshrl.u32 %v413, 7
        %v415 = vsub.s32 0, %v414
        %v416 = vrot.slane %v411, %v415
        %v417 = vlaneseq
        %v418 = vshrl.u32 %v417, 7
        %v419 = vsub.s32 1, %v418
        %v420 = vrot.slane %v411, %v419
        %v421 = vlaneseq
        %v422 = vshrl.u32 %v421, 7
        %v423 = vsub.s32 2, %v422
        %v424 = vrot.slane %v411, %v423
        %v425 = vlaneseq
        %v426 = vshrl.u32 %v425, 7
        %v427 = vsub.s32 3, %v426
        %v428 = vrot.slane %v411, %v427
        %v429 = vlaneseq
        %v430 = vshrl.u32 %v429, 7
        %v431 = vsub.s32 4, %v430
        %v432 = vrot.slane %v411, %v431
        %v433 = vlaneseq
        %v434 = vshrl.u32 %v433, 7
        %v435 = vsub.s32 5, %v434
        %v436 = vrot.slane %v411, %v435
        %v443 = vmul.f32 %v219, %v416
        %v444 = vmul.f32 %v220, %v420
        %v445 = vmul.f32 %v221, %v424
        %v446 = vmul.f32 %v222, %v428
        %v447 = vmul.f32 %v223, %v432
        %v448 = vmul.f32 %v224, %v436
        %v449 = vmul.f32 %v225, %v416
        %v450 = vmul.f32 %v226, %v420
        %v451 = vmul.f32 %v227, %v424
        %v452 = vmul.f32 %v228, %v428
        %v453 = vmul.f32 %v229, %v432
        %v454 = vmul.f32 %v230, %v436
        %v455 = vmul.f32 %v231, %v416
        %v456 = vmul.f32 %v232, %v420
        %v457 = vmul.f32 %v233, %v424
        %v458 = vmul.f32 %v234, %v428
        %v459 = vmul.f32 %v235, %v432
        %v460 = vmul.f32 %v236, %v436
        %v461 = vmul.f32 %v237, %v416
        %v462 = vmul.f32 %v238, %v420
        %v463 = vmul.f32 %v239, %v424
        %v464 = vmul.f32 %v240, %v428
        %v465 = vmul.f32 %v241, %v432
        %v466 = vmul.f32 %v242, %v436
        %v467 = vmul.f32 %v243, %v416
        %v468 = vmul.f32 %v244, %v420
        %v469 = vmul.f32 %v245, %v424
        %v470 = vmul.f32 %v246, %v428
        %v471 = vmul.f32 %v247, %v432
        %v472 = vmul.f32 %v248, %v436
        %v473 = vmul.f32 %v249, %v416
        %v474 = vmul.f32 %v250, %v420
        %v475 = vmul.f32 %v251, %v424
        %v476 = vmul.f32 %v252, %v428
        %v477 = vmul.f32 %v253, %v432
        %v478 = vmul.f32 %v254, %v436
        %v479 = vmul.f32 %v255, %v416
        %v480 = vmul.f32 %v256, %v420
        %v481 = vmul.f32 %v257, %v424
        %v482 = vmul.f32 %v258, %v428
        %v483 = vmul.f32 %v259, %v432
        %v484 = vmul.f32 %v260, %v436
        %v485 = vmul.f32 %v261, %v416
        %v486 = vmul.f32 %v262, %v420
        %v487 = vmul.f32 %v263, %v424
        %v488 = vmul.f32 %v264, %v428
        %v489 = vmul.f32 %v265, %v432
        %v490 = vmul.f32 %v266, %v436
        %v491 = vmul.f32 %v267, %v416
        %v492 = vmul.f32 %v268, %v420
        %v493 = vmul.f32 %v269, %v424
        %v494 = vmul.f32 %v270, %v428
        %v495 = vmul.f32 %v271, %v432
        %v496 = vmul.f32 %v272, %v436
        %v497 = vmul.f32 %v273, %v416
        %v498 = vmul.f32 %v274, %v420
        %v499 = vmul.f32 %v275, %v424
        %v500 = vmul.f32 %v276, %v428
        %v501 = vmul.f32 %v277, %v432
        %v502 = vmul.f32 %v278, %v436
        %v503 = vmul.f32 %v279, %v416
        %v504 = vmul.f32 %v280, %v420
        %v505 = vmul.f32 %v281, %v424
        %v506 = vmul.f32 %v282, %v428
        %v507 = vmul.f32 %v283, %v432
        %v508 = vmul.f32 %v284, %v436
        %v509 = vmul.f32 %v285, %v416
        %v510 = vmul.f32 %v286, %v420
        %v511 = vmul.f32 %v287, %v424
        %v512 = vmul.f32 %v288, %v428
        %v513 = vmul.f32 %v289, %v432
        %v514 = vmul.f32 %v290, %v436
        %v515 = vmul.f32 %v291, %v416
        %v516 = vmul.f32 %v292, %v420
        %v517 = vmul.f32 %v293, %v424
        %v518 = vmul.f32 %v294, %v428
        %v519 = vmul.f32 %v295, %v432
        %v520 = vmul.f32 %v296, %v436
        %v521 = vmul.f32 %v297, %v416
        %v522 = vmul.f32 %v298, %v420
        %v523 = vmul.f32 %v299, %v424
        %v524 = vmul.f32 %v300, %v428
        %v525 = vmul.f32 %v301, %v432
        %v526 = vmul.f32 %v302, %v436
        %v527 = vmul.f32 %v303, %v416
        %v528 = vmul.f32 %v304, %v420
        %v529 = vmul.f32 %v305, %v424
        %v530 = vmul.f32 %v306, %v428
        %v531 = vmul.f32 %v307, %v432
        %v532 = vmul.f32 %v308, %v436
        %v533 = vmul.f32 %v309, %v416
        %v534 = vmul.f32 %v310, %v420
        %v535 = vmul.f32 %v311, %v424
        %v536 = vmul.f32 %v312, %v428
        %v537 = vmul.f32 %v313, %v432
        %v538 = vmul.f32 %v314, %v436
        %v539 = vmul.f32 %v315, %v416
        %v540 = vmul.f32 %v316, %v420
        %v541 = vmul.f32 %v317, %v424
        %v542 = vmul.f32 %v318, %v428
        %v543 = vmul.f32 %v319, %v432
        %v544 = vmul.f32 %v320, %v436
        %v545 = vmul.f32 %v321, %v416
        %v546 = vmul.f32 %v322, %v420
        %v547 = vmul.f32 %v323, %v424
        %v548 = vmul.f32 %v324, %v428
        %v549 = vmul.f32 %v325, %v432
        %v550 = vmul.f32 %v326, %v436
        %v551 = vmul.f32 %v327, %v416
        %v552 = vmul.f32 %v328, %v420
        %v553 = vmul.f32 %v329, %v424
        %v554 = vmul.f32 %v330, %v428
        %v555 = vmul.f32 %v331, %v432
        %v556 = vmul.f32 %v332, %v436
        %v557 = vmul.f32 %v333, %v416
        %v558 = vmul.f32 %v334, %v420
        %v559 = vmul.f32 %v335, %v424
        %v560 = vmul.f32 %v336, %v428
        %v561 = vmul.f32 %v337, %v432
        %v562 = vmul.f32 %v338, %v436
        %v563 = vmul.f32 %v339, %v416
        %v564 = vmul.f32 %v340, %v420
        %v565 = vmul.f32 %v341, %v424
        %v566 = vmul.f32 %v342, %v428
        %v567 = vmul.f32 %v343, %v432
        %v568 = vmul.f32 %v344, %v436
        %v569 = vmul.f32 %v345, %v416
        %v570 = vmul.f32 %v346, %v420
        %v571 = vmul.f32 %v347, %v424
        %v572 = vmul.f32 %v348, %v428
        %v573 = vmul.f32 %v349, %v432
        %v574 = vmul.f32 %v350, %v436
        %v575 = vmul.f32 %v351, %v416
        %v576 = vmul.f32 %v352, %v420
        %v577 = vmul.f32 %v353, %v424
        %v578 = vmul.f32 %v354, %v428
        %v579 = vmul.f32 %v355, %v432
        %v580 = vmul.f32 %v356, %v436
        %v581 = vmul.f32 %v357, %v416
        %v582 = vmul.f32 %v358, %v420
        %v583 = vmul.f32 %v359, %v424
        %v584 = vmul.f32 %v360, %v428
        %v585 = vmul.f32 %v361, %v432
        %v586 = vmul.f32 %v362, %v436
        %v587 = vmul.f32 %v363, %v416
        %v588 = vmul.f32 %v364, %v420
        %v589 = vmul.f32 %v365, %v424
        %v590 = vmul.f32 %v366, %v428
        %v591 = vmul.f32 %v367, %v432
        %v592 = vmul.f32 %v368, %v436
        %v593 = vmul.f32 %v369, %v416
        %v594 = vmul.f32 %v370, %v420
        %v595 = vmul.f32 %v371, %v424
        %v596 = vmul.f32 %v372, %v428
        %v597 = vmul.f32 %v373, %v432
        %v598 = vmul.f32 %v374, %v436
        %v599 = vmul.f32 %v375, %v416
        %v600 = vmul.f32 %v376, %v420
        %v601 = vmul.f32 %v377, %v424
        %v602 = vmul.f32 %v378, %v428
        %v603 = vmul.f32 %v379, %v432
        %v604 = vmul.f32 %v380, %v436
        %v605 = vmul.f32 %v381, %v416
        %v606 = vmul.f32 %v382, %v420
        %v607 = vmul.f32 %v383, %v424
        %v608 = vmul.f32 %v384, %v428
        %v609 = vmul.f32 %v385, %v432
        %v610 = vmul.f32 %v386, %v436
        %v611 = vmul.f32 %v387, %v416
        %v612 = vmul.f32 %v388, %v420
        %v613 = vmul.f32 %v389, %v424
        %v614 = vmul.f32 %v390, %v428
        %v615 = vmul.f32 %v391, %v432
        %v616 = vmul.f32 %v392, %v436
        %v617 = vmul.f32 %v393, %v416
        %v618 = vmul.f32 %v394, %v420
        %v619 = vmul.f32 %v395, %v424
        %v620 = vmul.f32 %v396, %v428
        %v621 = vmul.f32 %v397, %v432
        %v622 = vmul.f32 %v398, %v436
        %v623 = vmul.f32 %v399, %v416
        %v624 = vmul.f32 %v400, %v420
        %v625 = vmul.f32 %v401, %v424
        %v626 = vmul.f32 %v402, %v428
        %v627 = vmul.f32 %v403, %v432
        %v628 = vmul.f32 %v404, %v436
        %v629 = vmul.f32 %v405, %v416
        %v630 = vmul.f32 %v406, %v420
        %v631 = vmul.f32 %v407, %v424
        %v632 = vmul.f32 %v408, %v428
        %v633 = vmul.f32 %v409, %v432
        %v634 = vmul.f32 %v410, %v436
        %v635 = vadd.f32 %v443, %v444
        %v636 = vadd.f32 %v635, %v445
        %v637 = vadd.f32 %v636, %v446
        %v638 = vadd.f32 %v637, %v447
        %v639 = vadd.f32 %v638, %v448
        %640 = vadd.xlane.f32.xlu0 %v639
        %v641 = vpop.xlane.xlu0 %640
        %v642 = vadd.f32 %v449, %v450
        %v643 = vadd.f32 %v642, %v451
        %v644 = vadd.f32 %v643, %v452
        %v645 = vadd.f32 %v644, %v453
        %v646 = vadd.f32 %v645, %v454
        %647 = vadd.xlane.f32.xlu0 %v646
        %v648 = vpop.xlane.xlu0 %647
        %v649 = vadd.f32 %v455, %v456
        %v650 = vadd.f32 %v649, %v457
        %v651 = vadd.f32 %v650, %v458
        %v652 = vadd.f32 %v651, %v459
        %v653 = vadd.f32 %v652, %v460
        %654 = vadd.xlane.f32.xlu0 %v653
        %v655 = vpop.xlane.xlu0 %654
        %v656 = vadd.f32 %v461, %v462
        %v657 = vadd.f32 %v656, %v463
        %v658 = vadd.f32 %v657, %v464
        %v659 = vadd.f32 %v658, %v465
        %v660 = vadd.f32 %v659, %v466
        %661 = vadd.xlane.f32.xlu0 %v660
        %v662 = vpop.xlane.xlu0 %661
        %v663 = vadd.f32 %v467, %v468
        %v664 = vadd.f32 %v663, %v469
        %v665 = vadd.f32 %v664, %v470
        %v666 = vadd.f32 %v665, %v471
        %v667 = vadd.f32 %v666, %v472
        %668 = vadd.xlane.f32.xlu0 %v667
        %v669 = vpop.xlane.xlu0 %668
        %v670 = vadd.f32 %v473, %v474
        %v671 = vadd.f32 %v670, %v475
        %v672 = vadd.f32 %v671, %v476
        %v673 = vadd.f32 %v672, %v477
        %v674 = vadd.f32 %v673, %v478
        %675 = vadd.xlane.f32.xlu0 %v674
        %v676 = vpop.xlane.xlu0 %675
        %v677 = vadd.f32 %v479, %v480
        %v678 = vadd.f32 %v677, %v481
        %v679 = vadd.f32 %v678, %v482
        %v680 = vadd.f32 %v679, %v483
        %v681 = vadd.f32 %v680, %v484
        %682 = vadd.xlane.f32.xlu0 %v681
        %v683 = vpop.xlane.xlu0 %682
        %v684 = vadd.f32 %v485, %v486
        %v685 = vadd.f32 %v684, %v487
        %v686 = vadd.f32 %v685, %v488
        %v687 = vadd.f32 %v686, %v489
        %v688 = vadd.f32 %v687, %v490
        %689 = vadd.xlane.f32.xlu0 %v688
        %v690 = vpop.xlane.xlu0 %689
        %v691 = vadd.f32 %v491, %v492
        %v692 = vadd.f32 %v691, %v493
        %v693 = vadd.f32 %v692, %v494
        %v694 = vadd.f32 %v693, %v495
        %v695 = vadd.f32 %v694, %v496
        %696 = vadd.xlane.f32.xlu0 %v695
        %v697 = vpop.xlane.xlu0 %696
        %v698 = vadd.f32 %v497, %v498
        %v699 = vadd.f32 %v698, %v499
        %v700 = vadd.f32 %v699, %v500
        %v701 = vadd.f32 %v700, %v501
        %v702 = vadd.f32 %v701, %v502
        %703 = vadd.xlane.f32.xlu0 %v702
        %v704 = vpop.xlane.xlu0 %703
        %v705 = vadd.f32 %v503, %v504
        %v706 = vadd.f32 %v705, %v505
        %v707 = vadd.f32 %v706, %v506
        %v708 = vadd.f32 %v707, %v507
        %v709 = vadd.f32 %v708, %v508
        %710 = vadd.xlane.f32.xlu0 %v709
        %v711 = vpop.xlane.xlu0 %710
        %v712 = vadd.f32 %v509, %v510
        %v713 = vadd.f32 %v712, %v511
        %v714 = vadd.f32 %v713, %v512
        %v715 = vadd.f32 %v714, %v513
        %v716 = vadd.f32 %v715, %v514
        %717 = vadd.xlane.f32.xlu0 %v716
        %v718 = vpop.xlane.xlu0 %717
        %v719 = vadd.f32 %v515, %v516
        %v720 = vadd.f32 %v719, %v517
        %v721 = vadd.f32 %v720, %v518
        %v722 = vadd.f32 %v721, %v519
        %v723 = vadd.f32 %v722, %v520
        %724 = vadd.xlane.f32.xlu0 %v723
        %v725 = vpop.xlane.xlu0 %724
        %v726 = vadd.f32 %v521, %v522
        %v727 = vadd.f32 %v726, %v523
        %v728 = vadd.f32 %v727, %v524
        %v729 = vadd.f32 %v728, %v525
        %v730 = vadd.f32 %v729, %v526
        %731 = vadd.xlane.f32.xlu0 %v730
        %v732 = vpop.xlane.xlu0 %731
        %v733 = vadd.f32 %v527, %v528
        %v734 = vadd.f32 %v733, %v529
        %v735 = vadd.f32 %v734, %v530
        %v736 = vadd.f32 %v735, %v531
        %v737 = vadd.f32 %v736, %v532
        %738 = vadd.xlane.f32.xlu0 %v737
        %v739 = vpop.xlane.xlu0 %738
        %v740 = vadd.f32 %v533, %v534
        %v741 = vadd.f32 %v740, %v535
        %v742 = vadd.f32 %v741, %v536
        %v743 = vadd.f32 %v742, %v537
        %v744 = vadd.f32 %v743, %v538
        %745 = vadd.xlane.f32.xlu0 %v744
        %v746 = vpop.xlane.xlu0 %745
        %v747 = vadd.f32 %v539, %v540
        %v748 = vadd.f32 %v747, %v541
        %v749 = vadd.f32 %v748, %v542
        %v750 = vadd.f32 %v749, %v543
        %v751 = vadd.f32 %v750, %v544
        %752 = vadd.xlane.f32.xlu0 %v751
        %v753 = vpop.xlane.xlu0 %752
        %v754 = vadd.f32 %v545, %v546
        %v755 = vadd.f32 %v754, %v547
        %v756 = vadd.f32 %v755, %v548
        %v757 = vadd.f32 %v756, %v549
        %v758 = vadd.f32 %v757, %v550
        %759 = vadd.xlane.f32.xlu0 %v758
        %v760 = vpop.xlane.xlu0 %759
        %v761 = vadd.f32 %v551, %v552
        %v762 = vadd.f32 %v761, %v553
        %v763 = vadd.f32 %v762, %v554
        %v764 = vadd.f32 %v763, %v555
        %v765 = vadd.f32 %v764, %v556
        %766 = vadd.xlane.f32.xlu0 %v765
        %v767 = vpop.xlane.xlu0 %766
        %v768 = vadd.f32 %v557, %v558
        %v769 = vadd.f32 %v768, %v559
        %v770 = vadd.f32 %v769, %v560
        %v771 = vadd.f32 %v770, %v561
        %v772 = vadd.f32 %v771, %v562
        %773 = vadd.xlane.f32.xlu0 %v772
        %v774 = vpop.xlane.xlu0 %773
        %v775 = vadd.f32 %v563, %v564
        %v776 = vadd.f32 %v775, %v565
        %v777 = vadd.f32 %v776, %v566
        %v778 = vadd.f32 %v777, %v567
        %v779 = vadd.f32 %v778, %v568
        %780 = vadd.xlane.f32.xlu0 %v779
        %v781 = vpop.xlane.xlu0 %780
        %v782 = vadd.f32 %v569, %v570
        %v783 = vadd.f32 %v782, %v571
        %v784 = vadd.f32 %v783, %v572
        %v785 = vadd.f32 %v784, %v573
        %v786 = vadd.f32 %v785, %v574
        %787 = vadd.xlane.f32.xlu0 %v786
        %v788 = vpop.xlane.xlu0 %787
        %v789 = vadd.f32 %v575, %v576
        %v790 = vadd.f32 %v789, %v577
        %v791 = vadd.f32 %v790, %v578
        %v792 = vadd.f32 %v791, %v579
        %v793 = vadd.f32 %v792, %v580
        %794 = vadd.xlane.f32.xlu0 %v793
        %v795 = vpop.xlane.xlu0 %794
        %v796 = vadd.f32 %v581, %v582
        %v797 = vadd.f32 %v796, %v583
        %v798 = vadd.f32 %v797, %v584
        %v799 = vadd.f32 %v798, %v585
        %v800 = vadd.f32 %v799, %v586
        %801 = vadd.xlane.f32.xlu0 %v800
        %v802 = vpop.xlane.xlu0 %801
        %v803 = vadd.f32 %v587, %v588
        %v804 = vadd.f32 %v803, %v589
        %v805 = vadd.f32 %v804, %v590
        %v806 = vadd.f32 %v805, %v591
        %v807 = vadd.f32 %v806, %v592
        %808 = vadd.xlane.f32.xlu0 %v807
        %v809 = vpop.xlane.xlu0 %808
        %v810 = vadd.f32 %v593, %v594
        %v811 = vadd.f32 %v810, %v595
        %v812 = vadd.f32 %v811, %v596
        %v813 = vadd.f32 %v812, %v597
        %v814 = vadd.f32 %v813, %v598
        %815 = vadd.xlane.f32.xlu0 %v814
        %v816 = vpop.xlane.xlu0 %815
        %v817 = vadd.f32 %v599, %v600
        %v818 = vadd.f32 %v817, %v601
        %v819 = vadd.f32 %v818, %v602
        %v820 = vadd.f32 %v819, %v603
        %v821 = vadd.f32 %v820, %v604
        %822 = vadd.xlane.f32.xlu0 %v821
        %v823 = vpop.xlane.xlu0 %822
        %v824 = vadd.f32 %v605, %v606
        %v825 = vadd.f32 %v824, %v607
        %v826 = vadd.f32 %v825, %v608
        %v827 = vadd.f32 %v826, %v609
        %v828 = vadd.f32 %v827, %v610
        %829 = vadd.xlane.f32.xlu0 %v828
        %v830 = vpop.xlane.xlu0 %829
        %v831 = vadd.f32 %v611, %v612
        %v832 = vadd.f32 %v831, %v613
        %v833 = vadd.f32 %v832, %v614
        %v834 = vadd.f32 %v833, %v615
        %v835 = vadd.f32 %v834, %v616
        %836 = vadd.xlane.f32.xlu0 %v835
        %v837 = vpop.xlane.xlu0 %836
        %v838 = vadd.f32 %v617, %v618
        %v839 = vadd.f32 %v838, %v619
        %v840 = vadd.f32 %v839, %v620
        %v841 = vadd.f32 %v840, %v621
        %v842 = vadd.f32 %v841, %v622
        %843 = vadd.xlane.f32.xlu0 %v842
        %v844 = vpop.xlane.xlu0 %843
        %v845 = vadd.f32 %v623, %v624
        %v846 = vadd.f32 %v845, %v625
        %v847 = vadd.f32 %v846, %v626
        %v848 = vadd.f32 %v847, %v627
        %v849 = vadd.f32 %v848, %v628
        %850 = vadd.xlane.f32.xlu0 %v849
        %v851 = vpop.xlane.xlu0 %850
        %v852 = vadd.f32 %v629, %v630
        %v853 = vadd.f32 %v852, %v631
        %v854 = vadd.f32 %v853, %v632
        %v855 = vadd.f32 %v854, %v633
        %v856 = vadd.f32 %v855, %v634
        %857 = vadd.xlane.f32.xlu0 %v856
        %v858 = vpop.xlane.xlu0 %857
        %v859 = vld [vmem:[#allocation2] sm:$0x1]
        %v861 = vlaneseq
        %v862 = vshrl.u32 %v861, 7
        %v863 = vsub.s32 0, %v862
        %v864 = vrot.slane %v859, %v863
        %v866 = vadd.f32 %v641, %v864
        %v867 = vadd.f32 %v648, %v864
        %v868 = vadd.f32 %v655, %v864
        %v869 = vadd.f32 %v662, %v864
        %v870 = vadd.f32 %v669, %v864
        %v871 = vadd.f32 %v676, %v864
        %v872 = vadd.f32 %v683, %v864
        %v873 = vadd.f32 %v690, %v864
        %v874 = vadd.f32 %v697, %v864
        %v875 = vadd.f32 %v704, %v864
        %v876 = vadd.f32 %v711, %v864
        %v877 = vadd.f32 %v718, %v864
        %v878 = vadd.f32 %v725, %v864
        %v879 = vadd.f32 %v732, %v864
        %v880 = vadd.f32 %v739, %v864
        %v881 = vadd.f32 %v746, %v864
        %v882 = vadd.f32 %v753, %v864
        %v883 = vadd.f32 %v760, %v864
        %v884 = vadd.f32 %v767, %v864
        %v885 = vadd.f32 %v774, %v864
        %v886 = vadd.f32 %v781, %v864
        %v887 = vadd.f32 %v788, %v864
        %v888 = vadd.f32 %v795, %v864
        %v889 = vadd.f32 %v802, %v864
        %v890 = vadd.f32 %v809, %v864
        %v891 = vadd.f32 %v816, %v864
        %v892 = vadd.f32 %v823, %v864
        %v893 = vadd.f32 %v830, %v864
        %v894 = vadd.f32 %v837, %v864
        %v895 = vadd.f32 %v844, %v864
        %v896 = vadd.f32 %v851, %v864
        %v897 = vadd.f32 %v858, %v864
        %vm898 = vcmask 7168
        %899 = vst.msk [vmem:[%s207] sm:$0xff] %vm898, %v866
        %900 = vst.msk [vmem:[%s207 + $0x8] sm:$0xff] %vm898, %v867
        %901 = vst.msk [vmem:[%s207 + $0x10] sm:$0xff] %vm898, %v868
        %902 = vst.msk [vmem:[%s207 + $0x18] sm:$0xff] %vm898, %v869
        %903 = vst.msk [vmem:[%s207 + $0x20] sm:$0xff] %vm898, %v870
        %904 = vst.msk [vmem:[%s207 + $0x28] sm:$0xff] %vm898, %v871
        %905 = vst.msk [vmem:[%s207 + $0x30] sm:$0xff] %vm898, %v872
        %906 = vst.msk [vmem:[%s207 + $0x38] sm:$0xff] %vm898, %v873
        %907 = vst.msk [vmem:[%s207 + $0x40] sm:$0xff] %vm898, %v874
        %908 = vst.msk [vmem:[%s207 + $0x48] sm:$0xff] %vm898, %v875
        %909 = vst.msk [vmem:[%s207 + $0x50] sm:$0xff] %vm898, %v876
        %910 = vst.msk [vmem:[%s207 + $0x58] sm:$0xff] %vm898, %v877
        %911 = vst.msk [vmem:[%s207 + $0x60] sm:$0xff] %vm898, %v878
        %912 = vst.msk [vmem:[%s207 + $0x68] sm:$0xff] %vm898, %v879
        %913 = vst.msk [vmem:[%s207 + $0x70] sm:$0xff] %vm898, %v880
        %914 = vst.msk [vmem:[%s207 + $0x78] sm:$0xff] %vm898, %v881
        %915 = vst.msk [vmem:[%s207 + $0x80] sm:$0xff] %vm898, %v882
        %916 = vst.msk [vmem:[%s207 + $0x88] sm:$0xff] %vm898, %v883
        %917 = vst.msk [vmem:[%s207 + $0x90] sm:$0xff] %vm898, %v884
        %918 = vst.msk [vmem:[%s207 + $0x98] sm:$0xff] %vm898, %v885
        %919 = vst.msk [vmem:[%s207 + $0xa0] sm:$0xff] %vm898, %v886
        %920 = vst.msk [vmem:[%s207 + $0xa8] sm:$0xff] %vm898, %v887
        %921 = vst.msk [vmem:[%s207 + $0xb0] sm:$0xff] %vm898, %v888
        %922 = vst.msk [vmem:[%s207 + $0xb8] sm:$0xff] %vm898, %v889
        %923 = vst.msk [vmem:[%s207 + $0xc0] sm:$0xff] %vm898, %v890
        %924 = vst.msk [vmem:[%s207 + $0xc8] sm:$0xff] %vm898, %v891
        %925 = vst.msk [vmem:[%s207 + $0xd0] sm:$0xff] %vm898, %v892
        %926 = vst.msk [vmem:[%s207 + $0xd8] sm:$0xff] %vm898, %v893
        %927 = vst.msk [vmem:[%s207 + $0xe0] sm:$0xff] %vm898, %v894
        %928 = vst.msk [vmem:[%s207 + $0xe8] sm:$0xff] %vm898, %v895
        %929 = vst.msk [vmem:[%s207 + $0xf0] sm:$0xff] %vm898, %v896
        %930 = vst.msk [vmem:[%s207 + $0xf8] sm:$0xff] %vm898, %v897
        %s931 = sand.u32 %s96, 1
        %s932 = sand.u32 %s96, 1
        %s933 = smul.addr %s932, 256
        %s934 = scalar_lea.vmem [#allocation7], %s933
        // Predicated region
        $region41: #{mlp_forward.1} parent=31 // pred_check
          %p935 = pneg %p106
        $region42: #{mlp_forward.1} parent=31 // pred_check_branch
          %937 = sbr.rel (%p935) target = $region44
        $region43: #{mlp_forward.1} parent=31 // pred_region
          %s938 = smul.u32 32, %s20
          %s939 = ssub.s32 38, %s938
          %p940 = scmp.lt.s32.totalorder %s939, 32
          %s941 = scalar_select %p940, %s939, 32
          %s942 = smul.u32 128, %s941
          %p943 = scmp.ne.s32.totalorder 0, %s942
          %s944 = smul.addr %s938, 8
          %s945 = scalar_lea.vmem %s3, %s944
          // Predicated region
          $region45: #{mlp_forward.1} parent=43 // pred_check
            %p946 = pneg %p943
          $region46: #{mlp_forward.1} parent=43 // pred_check_branch
            %948 = sbr.rel (%p946) target = $region48
          $region47: #{mlp_forward.1} parent=43 // pred_region
            // Predicated region
            $region49: #{mlp_forward.1} parent=47 // pred_check
              _
            $region50: #{mlp_forward.1} parent=47 // pred_check_branch
              %950 = sbr.rel (0) target = $region52
            $region51: #{mlp_forward.1} parent=47 // pred_region
              // Predicated region
              $region71: #{mlp_forward.1} parent=51 // pred_check
                _
              $region72: #{mlp_forward.1} parent=51 // pred_check_branch
                %1062 = sbr.rel (0) target = $region74
              $region73: #{mlp_forward.1} parent=51 // pred_region
                %s1063 = sshrl.u32 %s941, 5
                // While loop
                $region75: #{mlp_forward.1} parent=73 // loop_pre_header
                  _
                $region76: #{mlp_forward.1} parent=73 // loop_header
                  %s1065 = sphi 0, %s1067
                  %p1066 = scmp.ge.s32.totalorder %s1065, %s1063
                  %s1070 = sphi 0, %s1139
                  %s1071 = sphi %s934, %s1142
                  %s1072 = sphi %s945, %s1143
                $region77: #{mlp_forward.1} parent=73 // loop_header_branch
                  %1069 = sbr.rel (%p1066) target = $region81
                $region78: #{mlp_forward.1} parent=73 // loop_body
                  %v1073 = vld [vmem:[%s1071] sm:$0xff]
                  %1074 = vst [vmem:[%s1072] sm:$0xff] %v1073
                  %v1075 = vld [vmem:[%s1071 + $0x8] sm:$0xff]
                  %1076 = vst [vmem:[%s1072 + $0x8] sm:$0xff] %v1075
                  %v1077 = vld [vmem:[%s1071 + $0x10] sm:$0xff]
                  %1078 = vst [vmem:[%s1072 + $0x10] sm:$0xff] %v1077
                  %v1079 = vld [vmem:[%s1071 + $0x18] sm:$0xff]
                  %1080 = vst [vmem:[%s1072 + $0x18] sm:$0xff] %v1079
                  %v1081 = vld [vmem:[%s1071 + $0x20] sm:$0xff]
                  %1082 = vst [vmem:[%s1072 + $0x20] sm:$0xff] %v1081
                  %v1083 = vld [vmem:[%s1071 + $0x28] sm:$0xff]
                  %1084 = vst [vmem:[%s1072 + $0x28] sm:$0xff] %v1083
                  %v1085 = vld [vmem:[%s1071 + $0x30] sm:$0xff]
                  %1086 = vst [vmem:[%s1072 + $0x30] sm:$0xff] %v1085
                  %v1087 = vld [vmem:[%s1071 + $0x38] sm:$0xff]
                  %1088 = vst [vmem:[%s1072 + $0x38] sm:$0xff] %v1087
                  %v1089 = vld [vmem:[%s1071 + $0x40] sm:$0xff]
                  %1090 = vst [vmem:[%s1072 + $0x40] sm:$0xff] %v1089
                  %v1091 = vld [vmem:[%s1071 + $0x48] sm:$0xff]
                  %1092 = vst [vmem:[%s1072 + $0x48] sm:$0xff] %v1091
                  %v1093 = vld [vmem:[%s1071 + $0x50] sm:$0xff]
                  %1094 = vst [vmem:[%s1072 + $0x50] sm:$0xff] %v1093
                  %v1095 = vld [vmem:[%s1071 + $0x58] sm:$0xff]
                  %1096 = vst [vmem:[%s1072 + $0x58] sm:$0xff] %v1095
                  %v1097 = vld [vmem:[%s1071 + $0x60] sm:$0xff]
                  %1098 = vst [vmem:[%s1072 + $0x60] sm:$0xff] %v1097
                  %v1099 = vld [vmem:[%s1071 + $0x68] sm:$0xff]
                  %1100 = vst [vmem:[%s1072 + $0x68] sm:$0xff] %v1099
                  %v1101 = vld [vmem:[%s1071 + $0x70] sm:$0xff]
                  %1102 = vst [vmem:[%s1072 + $0x70] sm:$0xff] %v1101
                  %v1103 = vld [vmem:[%s1071 + $0x78] sm:$0xff]
                  %1104 = vst [vmem:[%s1072 + $0x78] sm:$0xff] %v1103
                  %v1105 = vld [vmem:[%s1071 + $0x80] sm:$0xff]
                  %1106 = vst [vmem:[%s1072 + $0x80] sm:$0xff] %v1105
                  %v1107 = vld [vmem:[%s1071 + $0x88] sm:$0xff]
                  %1108 = vst [vmem:[%s1072 + $0x88] sm:$0xff] %v1107
                  %v1109 = vld [vmem:[%s1071 + $0x90] sm:$0xff]
                  %1110 = vst [vmem:[%s1072 + $0x90] sm:$0xff] %v1109
                  %v1111 = vld [vmem:[%s1071 + $0x98] sm:$0xff]
                  %1112 = vst [vmem:[%s1072 + $0x98] sm:$0xff] %v1111
                  %v1113 = vld [vmem:[%s1071 + $0xa0] sm:$0xff]
                  %1114 = vst [vmem:[%s1072 + $0xa0] sm:$0xff] %v1113
                  %v1115 = vld [vmem:[%s1071 + $0xa8] sm:$0xff]
                  %1116 = vst [vmem:[%s1072 + $0xa8] sm:$0xff] %v1115
                  %v1117 = vld [vmem:[%s1071 + $0xb0] sm:$0xff]
                  %1118 = vst [vmem:[%s1072 + $0xb0] sm:$0xff] %v1117
                  %v1119 = vld [vmem:[%s1071 + $0xb8] sm:$0xff]
                  %1120 = vst [vmem:[%s1072 + $0xb8] sm:$0xff] %v1119
                  %v1121 = vld [vmem:[%s1071 + $0xc0] sm:$0xff]
                  %1122 = vst [vmem:[%s1072 + $0xc0] sm:$0xff] %v1121
                  %v1123 = vld [vmem:[%s1071 + $0xc8] sm:$0xff]
                  %1124 = vst [vmem:[%s1072 + $0xc8] sm:$0xff] %v1123
                  %v1125 = vld [vmem:[%s1071 + $0xd0] sm:$0xff]
                  %1126 = vst [vmem:[%s1072 + $0xd0] sm:$0xff] %v1125
                  %v1127 = vld [vmem:[%s1071 + $0xd8] sm:$0xff]
                  %1128 = vst [vmem:[%s1072 + $0xd8] sm:$0xff] %v1127
                  %v1129 = vld [vmem:[%s1071 + $0xe0] sm:$0xff]
                  %1130 = vst [vmem:[%s1072 + $0xe0] sm:$0xff] %v1129
                  %v1131 = vld [vmem:[%s1071 + $0xe8] sm:$0xff]
                  %1132 = vst [vmem:[%s1072 + $0xe8] sm:$0xff] %v1131
                  %v1133 = vld [vmem:[%s1071 + $0xf0] sm:$0xff]
                  %1134 = vst [vmem:[%s1072 + $0xf0] sm:$0xff] %v1133
                  %v1135 = vld [vmem:[%s1071 + $0xf8] sm:$0xff]
                  %1136 = vst [vmem:[%s1072 + $0xf8] sm:$0xff] %v1135
                  %s1137 = sadd.s32 1, %s1070
                  %p1138 = scmp.ge.s32.totalorder %s1137, %s1063
                  %s1139 = scalar_select %p1138, 0, %s1137
                  %s1140 = smul.u32 %s1139, 256
                  %s1141 = smul.u32 %s1139, 256
                  %s1142 = scalar_lea.vmem %s934, %s1140 [#allocation7]
                  %s1143 = scalar_lea.vmem %s945, %s1141
                $region79: #{mlp_forward.1} parent=73 // loop_footer
                  %s1067 = sadd.s32 %s1065, 1
                $region80: #{mlp_forward.1} parent=73 // loop_footer_branch
                  %1064 = sbr.rel target = $region76
                $region81: #{mlp_forward.1} parent=73 // loop_exit
                  _
                %s1144 = sshrl.u32 %s941, 5
                %s1145 = sand.u32 %s941, 31
                %s1146 = smul.u32 %s1144, 32
                %s1147 = smul.u32 8, %s1146
                %s1148 = scalar_lea.vmem %s934, %s1147 [#allocation7]
                %s1149 = smul.u32 8, %s1146
                %s1150 = scalar_lea.vmem %s945, %s1149
                // While loop
                $region82: #{mlp_forward.1} parent=73 // loop_pre_header
                  _
                $region83: #{mlp_forward.1} parent=73 // loop_header
                  %s1152 = sphi 0, %s1154
                  %p1153 = scmp.ge.s32.totalorder %s1152, %s1145
                  %s1157 = sphi 0, %s1164
                  %s1158 = sphi %s1148, %s1167
                  %s1159 = sphi %s1150, %s1168
                $region84: #{mlp_forward.1} parent=73 // loop_header_branch
                  %1156 = sbr.rel (%p1153) target = $region88
                $region85: #{mlp_forward.1} parent=73 // loop_body
                  %v1160 = vld [vmem:[%s1158] sm:$0xff]
                  %1161 = vst [vmem:[%s1159] sm:$0xff] %v1160
                  %s1162 = sadd.s32 1, %s1157
                  %p1163 = scmp.ge.s32.totalorder %s1162, %s1145
                  %s1164 = scalar_select %p1163, 0, %s1162
                  %s1165 = smul.u32 %s1164, 8
                  %s1166 = smul.u32 %s1164, 8
                  %s1167 = scalar_lea.vmem %s1148, %s1165 [#allocation7]
                  %s1168 = scalar_lea.vmem %s1150, %s1166
                $region86: #{mlp_forward.1} parent=73 // loop_footer
                  %s1154 = sadd.s32 %s1152, 1
                $region87: #{mlp_forward.1} parent=73 // loop_footer_branch
                  %1151 = sbr.rel target = $region83
                $region88: #{mlp_forward.1} parent=73 // loop_exit
                  _
              $region74: #{mlp_forward.1} parent=51 // pred_fallthru
                _
              // Predicated region
              $region89: #{mlp_forward.1} parent=51 // pred_check
                _
              $region90: #{mlp_forward.1} parent=51 // pred_check_branch
                %1170 = sbr.rel target = $region92
              $region91: #{mlp_forward.1} parent=51 // pred_region
                _
              $region92: #{mlp_forward.1} parent=51 // pred_fallthru
                _
            $region52: #{mlp_forward.1} parent=47 // pred_fallthru
              _
            // Predicated region
            $region53: #{mlp_forward.1} parent=47 // pred_check
              _
            $region54: #{mlp_forward.1} parent=47 // pred_check_branch
              %952 = sbr.rel target = $region56
            $region55: #{mlp_forward.1} parent=47 // pred_region
              %s954 = ssub.s32 256, 1
              %s955 = sshrl.u32 %s941, 5
              // While loop
              $region57: #{mlp_forward.1} parent=55 // loop_pre_header
                _
              $region58: #{mlp_forward.1} parent=55 // loop_header
                %s957 = sphi 0, %s959
                %p958 = scmp.ge.s32.totalorder %s957, %s955
                %s962 = sphi 0, %s1031
                %s963 = sphi %s934, %s1034
                %s964 = sphi %s945, %s1035
              $region59: #{mlp_forward.1} parent=55 // loop_header_branch
                %961 = sbr.rel (%p958) target = $region63
              $region60: #{mlp_forward.1} parent=55 // loop_body
                %v965 = vld [vmem:[%s963] sm:%s954]
                %966 = vst [vmem:[%s964] sm:%s954] %v965
                %v967 = vld [vmem:[%s963 + $0x8] sm:%s954]
                %968 = vst [vmem:[%s964 + $0x8] sm:%s954] %v967
                %v969 = vld [vmem:[%s963 + $0x10] sm:%s954]
                %970 = vst [vmem:[%s964 + $0x10] sm:%s954] %v969
                %v971 = vld [vmem:[%s963 + $0x18] sm:%s954]
                %972 = vst [vmem:[%s964 + $0x18] sm:%s954] %v971
                %v973 = vld [vmem:[%s963 + $0x20] sm:%s954]
                %974 = vst [vmem:[%s964 + $0x20] sm:%s954] %v973
                %v975 = vld [vmem:[%s963 + $0x28] sm:%s954]
                %976 = vst [vmem:[%s964 + $0x28] sm:%s954] %v975
                %v977 = vld [vmem:[%s963 + $0x30] sm:%s954]
                %978 = vst [vmem:[%s964 + $0x30] sm:%s954] %v977
                %v979 = vld [vmem:[%s963 + $0x38] sm:%s954]
                %980 = vst [vmem:[%s964 + $0x38] sm:%s954] %v979
                %v981 = vld [vmem:[%s963 + $0x40] sm:%s954]
                %982 = vst [vmem:[%s964 + $0x40] sm:%s954] %v981
                %v983 = vld [vmem:[%s963 + $0x48] sm:%s954]
                %984 = vst [vmem:[%s964 + $0x48] sm:%s954] %v983
                %v985 = vld [vmem:[%s963 + $0x50] sm:%s954]
                %986 = vst [vmem:[%s964 + $0x50] sm:%s954] %v985
                %v987 = vld [vmem:[%s963 + $0x58] sm:%s954]
                %988 = vst [vmem:[%s964 + $0x58] sm:%s954] %v987
                %v989 = vld [vmem:[%s963 + $0x60] sm:%s954]
                %990 = vst [vmem:[%s964 + $0x60] sm:%s954] %v989
                %v991 = vld [vmem:[%s963 + $0x68] sm:%s954]
                %992 = vst [vmem:[%s964 + $0x68] sm:%s954] %v991
                %v993 = vld [vmem:[%s963 + $0x70] sm:%s954]
                %994 = vst [vmem:[%s964 + $0x70] sm:%s954] %v993
                %v995 = vld [vmem:[%s963 + $0x78] sm:%s954]
                %996 = vst [vmem:[%s964 + $0x78] sm:%s954] %v995
                %v997 = vld [vmem:[%s963 + $0x80] sm:%s954]
                %998 = vst [vmem:[%s964 + $0x80] sm:%s954] %v997
                %v999 = vld [vmem:[%s963 + $0x88] sm:%s954]
                %1000 = vst [vmem:[%s964 + $0x88] sm:%s954] %v999
                %v1001 = vld [vmem:[%s963 + $0x90] sm:%s954]
                %1002 = vst [vmem:[%s964 + $0x90] sm:%s954] %v1001
                %v1003 = vld [vmem:[%s963 + $0x98] sm:%s954]
                %1004 = vst [vmem:[%s964 + $0x98] sm:%s954] %v1003
                %v1005 = vld [vmem:[%s963 + $0xa0] sm:%s954]
                %1006 = vst [vmem:[%s964 + $0xa0] sm:%s954] %v1005
                %v1007 = vld [vmem:[%s963 + $0xa8] sm:%s954]
                %1008 = vst [vmem:[%s964 + $0xa8] sm:%s954] %v1007
                %v1009 = vld [vmem:[%s963 + $0xb0] sm:%s954]
                %1010 = vst [vmem:[%s964 + $0xb0] sm:%s954] %v1009
                %v1011 = vld [vmem:[%s963 + $0xb8] sm:%s954]
                %1012 = vst [vmem:[%s964 + $0xb8] sm:%s954] %v1011
                %v1013 = vld [vmem:[%s963 + $0xc0] sm:%s954]
                %1014 = vst [vmem:[%s964 + $0xc0] sm:%s954] %v1013
                %v1015 = vld [vmem:[%s963 + $0xc8] sm:%s954]
                %1016 = vst [vmem:[%s964 + $0xc8] sm:%s954] %v1015
                %v1017 = vld [vmem:[%s963 + $0xd0] sm:%s954]
                %1018 = vst [vmem:[%s964 + $0xd0] sm:%s954] %v1017
                %v1019 = vld [vmem:[%s963 + $0xd8] sm:%s954]
                %1020 = vst [vmem:[%s964 + $0xd8] sm:%s954] %v1019
                %v1021 = vld [vmem:[%s963 + $0xe0] sm:%s954]
                %1022 = vst [vmem:[%s964 + $0xe0] sm:%s954] %v1021
                %v1023 = vld [vmem:[%s963 + $0xe8] sm:%s954]
                %1024 = vst [vmem:[%s964 + $0xe8] sm:%s954] %v1023
                %v1025 = vld [vmem:[%s963 + $0xf0] sm:%s954]
                %1026 = vst [vmem:[%s964 + $0xf0] sm:%s954] %v1025
                %v1027 = vld [vmem:[%s963 + $0xf8] sm:%s954]
                %1028 = vst [vmem:[%s964 + $0xf8] sm:%s954] %v1027
                %s1029 = sadd.s32 1, %s962
                %p1030 = scmp.ge.s32.totalorder %s1029, %s955
                %s1031 = scalar_select %p1030, 0, %s1029
                %s1032 = smul.u32 %s1031, 256
                %s1033 = smul.u32 %s1031, 256
                %s1034 = scalar_lea.vmem %s934, %s1032 [#allocation7]
                %s1035 = scalar_lea.vmem %s945, %s1033
              $region61: #{mlp_forward.1} parent=55 // loop_footer
                %s959 = sadd.s32 %s957, 1
              $region62: #{mlp_forward.1} parent=55 // loop_footer_branch
                %956 = sbr.rel target = $region58
              $region63: #{mlp_forward.1} parent=55 // loop_exit
                _
              %s1036 = sshrl.u32 %s941, 5
              %s1037 = sand.u32 %s941, 31
              %s1038 = smul.u32 %s1036, 32
              %s1039 = smul.u32 8, %s1038
              %s1040 = scalar_lea.vmem %s934, %s1039 [#allocation7]
              %s1041 = smul.u32 8, %s1038
              %s1042 = scalar_lea.vmem %s945, %s1041
              // While loop
              $region64: #{mlp_forward.1} parent=55 // loop_pre_header
                _
              $region65: #{mlp_forward.1} parent=55 // loop_header
                %s1044 = sphi 0, %s1046
                %p1045 = scmp.ge.s32.totalorder %s1044, %s1037
                %s1049 = sphi 0, %s1056
                %s1050 = sphi %s1040, %s1059
                %s1051 = sphi %s1042, %s1060
              $region66: #{mlp_forward.1} parent=55 // loop_header_branch
                %1048 = sbr.rel (%p1045) target = $region70
              $region67: #{mlp_forward.1} parent=55 // loop_body
                %v1052 = vld [vmem:[%s1050] sm:%s954]
                %1053 = vst [vmem:[%s1051] sm:%s954] %v1052
                %s1054 = sadd.s32 1, %s1049
                %p1055 = scmp.ge.s32.totalorder %s1054, %s1037
                %s1056 = scalar_select %p1055, 0, %s1054
                %s1057 = smul.u32 %s1056, 8
                %s1058 = smul.u32 %s1056, 8
                %s1059 = scalar_lea.vmem %s1040, %s1057 [#allocation7]
                %s1060 = scalar_lea.vmem %s1042, %s1058
              $region68: #{mlp_forward.1} parent=55 // loop_footer
                %s1046 = sadd.s32 %s1044, 1
              $region69: #{mlp_forward.1} parent=55 // loop_footer_branch
                %1043 = sbr.rel target = $region65
              $region70: #{mlp_forward.1} parent=55 // loop_exit
                _
            $region56: #{mlp_forward.1} parent=47 // pred_fallthru
              _
          $region48: #{mlp_forward.1} parent=43 // pred_fallthru
            _
          %1171 = vnop
        $region44: #{mlp_forward.1} parent=31 // pred_fallthru
          _
      $region32: #{mlp_forward.1} parent=5 // pred_fallthru
        _
      %p1172 = scmp.le.s32.totalorder 2, %s15
      // Predicated region
      $region93: #{mlp_forward.1} parent=5 // pred_check
        %p1173 = pneg %p1172
      $region94: #{mlp_forward.1} parent=5 // pred_check_branch
        %1175 = sbr.rel (%p1173) target = $region96
      $region95: #{mlp_forward.1} parent=5 // pred_region
        %s1176 = ssub.s32 %s15, 2
        // Predicated region
        $region97: #{mlp_forward.1} parent=95 // pred_check
          %p1177 = pneg %p112
        $region98: #{mlp_forward.1} parent=95 // pred_check_branch
          %1179 = sbr.rel (%p1177) target = $region100
        $region99: #{mlp_forward.1} parent=95 // pred_region
          %s1180 = sand.u32 %s97, 1
          %s1181 = sand.u32 %s97, 1
          %s1182 = smul.addr %s1181, 256
          %s1183 = scalar_lea.vmem [#allocation7], %s1182
        $region100: #{mlp_forward.1} parent=95 // pred_fallthru
          _
      $region96: #{mlp_forward.1} parent=5 // pred_fallthru
        _
    $region6: #{mlp_forward.1} parent=1 // loop_footer
      %s19 = sadd.s32 1, %s15
    $region7: #{mlp_forward.1} parent=1 // loop_footer_branch
      %14 = sbr.rel target = $region3
    $region8: #{mlp_forward.1} parent=1 // loop_exit
      _
    %1184 = vsyncpa [#allocation4], 1
    %s1185 = scalar_lea.sflag [#allocation4], 1
    %1186 = vsyncpa %s1185, 1
    %1187 = vsyncpa [#allocation6], 1

</llo_original>
